<compile_context>
chip_gen: v7x
topology: tpu7x:2x2x1
jax: 0.10.0
libtpu: 0.0.40
codegen_flags: <defaults>
</compile_context>

<pallas_src>
import functools

import jax
import jax.numpy as jnp
from jax.experimental import pallas as pl
from jax.experimental.pallas import tpu as pltpu


def _mlp_kernel(x_ref, w1_ref, b1_ref, w2_ref, b2_ref, w3_ref, b3_ref, o_ref):
    # Lane-dense layout — batch is the last (lane) dimension.
    #   x_ref:  (1, TM)  f32
    #   w1_ref: (H, 1)   f32   b1_ref: (H, 1) f32     (column form of fc1)
    #   w2_ref: (H, H)   bf16  (= W2^T)   b2_ref: (H, 1) f32
    #   w3_ref: (H, 1)   f32   b3_ref: (1, 1) f32
    #   o_ref:  (1, TM)  f32
    x = x_ref[...]                                                   # (1, TM)

    # fc1: Linear(1 -> H) is a rank-1 outer product -> pure VPU broadcast FMA.
    h1 = jnp.maximum(w1_ref[...] * x + b1_ref[...], 0.0)            # (H, TM) f32

    # fc2: the only real matmul; bf16 operands into the MXU, f32 accumulate,
    # batch on the MXU's N (lane) axis.
    h2 = jnp.dot(w2_ref[...], h1.astype(jnp.bfloat16),
                 preferred_element_type=jnp.float32)                 # (H, TM) f32
    h2 = jnp.maximum(h2 + b2_ref[...], 0.0)

    # fc3: Linear(H -> 1) is a 64-deep reduction -> VPU mul + sublane reduce.
    # TODO(synk): could be pushed onto the MXU ((1,H) @ (H,TM)) for ~5-15%
    # once profiling shows VALU/XLU as the binding slot; kept on the VPU for
    # full-f32 precision of the final layer.
    out = jnp.sum(w3_ref[...] * h2, axis=0, keepdims=True) + b3_ref[...]
    o_ref[...] = out.astype(o_ref.dtype)                             # (1, TM)


def _round_up(v, m):
    return ((v + m - 1) // m) * m


@functools.partial(jax.jit, static_argnames=("block_m",))
def electric_demand_forward(x, params, *, block_m=8192):
    """x: (N, 1) float32.  params: dict of (w1, b1, w2, b2, w3, b3).

    Semantically identical to the PyTorch forward:
        relu(fc1(x)) -> relu(fc2(.)) -> fc3(.)
    (fc2 runs with bf16 MXU inputs / f32 accumulation.)
    """
    w1, b1, w2, b2, w3, b3 = (
        params["w1"], params["b1"], params["w2"],
        params["b2"], params["w3"], params["b3"],
    )
    n, in_dim = x.shape
    assert in_dim == 1
    hidden = w1.shape[1]

    # Column-form parameter views for the lane-dense kernel layout.
    w1c = w1.T                                   # (H, 1) f32
    b1c = b1.T                                   # (H, 1) f32
    w2t = w2.T.astype(jnp.bfloat16)              # (H, H) bf16  (MXU-native)
    b2c = b2.T                                   # (H, 1) f32
    w3c = w3                                     # (H, 1) f32
    b3s = b3                                     # (1, 1) f32

    # Effective batch tile:
    #  * lane-aligned (multiple of 128),
    #  * capped near n/2 so the grid keeps >= 2 blocks (v7x megacore split),
    #  * at most block_m (8192 default: three (64, TM) slabs stay well inside
    #    v5e's 16 MiB scoped-VMEM default while amortizing grid-step overhead).
    block_m = max(128, _round_up(block_m, 128))
    half = _round_up(pl.cdiv(n, 2), 128)
    bm = max(128, min(block_m, half))
    grid = (pl.cdiv(n, bm),)

    # No host-side zero-pad copy: hand Pallas the raw (1, N) lane view and let
    # it mask the ragged final block.
    x_lane = x.reshape(1, n)

    full = lambda shape: pl.BlockSpec(shape, lambda i: (0, 0))  # resident block

    out = pl.pallas_call(
        _mlp_kernel,
        out_shape=jax.ShapeDtypeStruct((1, n), jnp.float32),
        grid_spec=pl.GridSpec(
            grid=grid,
            in_specs=[
                pl.BlockSpec((1, bm), lambda i: (0, i)),        # x tile (lanes)
                full((hidden, 1)),                              # w1 (col)
                full((hidden, 1)),                              # b1 (col)
                full((hidden, hidden)),                         # W2^T (bf16)
                full((hidden, 1)),                              # b2 (col)
                full((hidden, 1)),                              # w3 (col)
                full((1, 1)),                                   # b3
            ],
            out_specs=pl.BlockSpec((1, bm), lambda i: (0, i)),
        ),
        compiler_params=pltpu.CompilerParams(
            dimension_semantics=("parallel",),
        ),
    )(x_lane, w1c, b1c, w2t, b2c, w3c, b3s)

    return out.reshape(n, 1)


def init_params(key, hidden=64):
    """Deterministic synthetic init (PyTorch-style uniform fan-in bounds)."""
    ks = jax.random.split(key, 6)

    def linear_init(kw, kb, fan_in, fan_out):
        bound = 1.0 / jnp.sqrt(fan_in)
        w = jax.random.uniform(kw, (fan_in, fan_out), jnp.float32, -bound, bound)
        b = jax.random.uniform(kb, (1, fan_out), jnp.float32, -bound, bound)
        return w, b

    w1, b1 = linear_init(ks[0], ks[1], 1, hidden)
    w2, b2 = linear_init(ks[2], ks[3], hidden, hidden)
    w3, b3 = linear_init(ks[4], ks[5], hidden, 1)
    return {"w1": w1, "b1": b1, "w2": w2, "b2": b2, "w3": w3, "b3": b3}


def _reference_forward(x, p):
    h1 = jnp.maximum(x @ p["w1"] + p["b1"], 0.0)
    h2 = jnp.maximum(h1 @ p["w2"] + p["b2"], 0.0)
    return h2 @ p["w3"] + p["b3"]


if __name__ == "__main__":
    key = jax.random.PRNGKey(0)
    k_param, k_x = jax.random.split(key)

    params = init_params(k_param, hidden=64)

    # Small batch of scalar inputs (e.g. normalized time-of-day values).
    # Deliberately NOT a multiple of 128 to exercise the ragged final block,
    # and large enough that the v7x-aware cap yields a 2-block grid.
    n = 300
    x = jax.random.uniform(k_x, (n, 1), jnp.float32)

    out = electric_demand_forward(x, params)
    out = jax.block_until_ready(out)

    ref = _reference_forward(x, params)
    assert out.shape == (n, 1)
    # fc2 uses bf16 MXU inputs (f32 accumulation), so compare against the
    # f32 reference with a bf16-appropriate tolerance.
    assert jnp.allclose(out, ref, atol=5e-2, rtol=5e-2)

    print("KERNEL_OK")
</pallas_src>

<mosaic_0001>
module attributes {stable_mosaic.version = 11 : i64} {
  func.func @_mlp_kernel(%arg0: i32, %arg1: memref<1x256xf32, #tpu.memory_space<vmem>>, %arg2: memref<64x1xf32, #tpu.memory_space<vmem>>, %arg3: memref<64x1xf32, #tpu.memory_space<vmem>>, %arg4: memref<64x64xbf16, #tpu.memory_space<vmem>>, %arg5: memref<64x1xf32, #tpu.memory_space<vmem>>, %arg6: memref<64x1xf32, #tpu.memory_space<vmem>>, %arg7: memref<1x1xf32, #tpu.memory_space<vmem>>, %arg8: memref<1x256xf32, #tpu.memory_space<vmem>>) attributes {dimension_semantics = [#tpu.dimension_semantics<parallel>], iteration_bounds = array<i64: 2>, scalar_prefetch = 0 : i64, scratch_operands = 0 : i64, tpu.core_type = #tpu.core_type<tc>, window_params = [{transform_indices = @transform_0, window_bounds = array<i64: 1, 256>}, {pipeline_mode = #tpu.pipeline_mode<synchronous>, transform_indices = @transform_1, window_bounds = array<i64: 64, 1>}, {pipeline_mode = #tpu.pipeline_mode<synchronous>, transform_indices = @transform_2, window_bounds = array<i64: 64, 1>}, {pipeline_mode = #tpu.pipeline_mode<synchronous>, transform_indices = @transform_3, window_bounds = array<i64: 64, 64>}, {pipeline_mode = #tpu.pipeline_mode<synchronous>, transform_indices = @transform_4, window_bounds = array<i64: 64, 1>}, {pipeline_mode = #tpu.pipeline_mode<synchronous>, transform_indices = @transform_5, window_bounds = array<i64: 64, 1>}, {pipeline_mode = #tpu.pipeline_mode<synchronous>, transform_indices = @transform_6, window_bounds = array<i64: 1, 1>}, {transform_indices = @transform_7, window_bounds = array<i64: 1, 256>}]} {
    %c0 = arith.constant 0 : index
    %c0_0 = arith.constant 0 : index
    %0 = vector.load %arg1[%c0, %c0_0] : memref<1x256xf32, #tpu.memory_space<vmem>>, vector<1x256xf32>
    %c0_1 = arith.constant 0 : index
    %c0_2 = arith.constant 0 : index
    %1 = vector.load %arg2[%c0_1, %c0_2] : memref<64x1xf32, #tpu.memory_space<vmem>>, vector<64x1xf32>
    %2 = vector.broadcast %1 : vector<64x1xf32> to vector<64x256xf32>
    %3 = vector.broadcast %0 : vector<1x256xf32> to vector<64x256xf32>
    %4 = arith.mulf %2, %3 : vector<64x256xf32>
    %c0_3 = arith.constant 0 : index
    %c0_4 = arith.constant 0 : index
    %5 = vector.load %arg3[%c0_3, %c0_4] : memref<64x1xf32, #tpu.memory_space<vmem>>, vector<64x1xf32>
    %6 = vector.broadcast %5 : vector<64x1xf32> to vector<64x256xf32>
    %7 = arith.addf %4, %6 : vector<64x256xf32>
    %cst = arith.constant 0.000000e+00 : f32
    %8 = vector.broadcast %cst : f32 to vector<64x256xf32>
    %9 = arith.maximumf %7, %8 : vector<64x256xf32>
    %c0_5 = arith.constant 0 : index
    %c0_6 = arith.constant 0 : index
    %10 = vector.load %arg4[%c0_5, %c0_6] : memref<64x64xbf16, #tpu.memory_space<vmem>>, vector<64x64xbf16>
    %11 = arith.truncf %9 : vector<64x256xf32> to vector<64x256xbf16>
    %cst_7 = arith.constant dense<0.000000e+00> : vector<64x256xf32>
    %12 = tpu.matmul %10, %11, %cst_7 {dimension_numbers = #tpu.dot_dimension_numbers<[1], [0], [0], [1], [0, 0, 1, 1], [], []>} : vector<64x64xbf16>, vector<64x256xbf16>, vector<64x256xf32> -> vector<64x256xf32>
    %c0_8 = arith.constant 0 : index
    %c0_9 = arith.constant 0 : index
    %13 = vector.load %arg5[%c0_8, %c0_9] : memref<64x1xf32, #tpu.memory_space<vmem>>, vector<64x1xf32>
    %14 = vector.broadcast %13 : vector<64x1xf32> to vector<64x256xf32>
    %15 = arith.addf %12, %14 : vector<64x256xf32>
    %cst_10 = arith.constant 0.000000e+00 : f32
    %16 = vector.broadcast %cst_10 : f32 to vector<64x256xf32>
    %17 = arith.maximumf %15, %16 : vector<64x256xf32>
    %c0_11 = arith.constant 0 : index
    %c0_12 = arith.constant 0 : index
    %18 = vector.load %arg6[%c0_11, %c0_12] : memref<64x1xf32, #tpu.memory_space<vmem>>, vector<64x1xf32>
    %19 = vector.broadcast %18 : vector<64x1xf32> to vector<64x256xf32>
    %20 = arith.mulf %19, %17 : vector<64x256xf32>
    %cst_13 = arith.constant dense<0.000000e+00> : vector<256xf32>
    %21 = vector.multi_reduction <add>, %20, %cst_13 [0] : vector<64x256xf32> to vector<256xf32>
    %22 = vector.shape_cast %21 : vector<256xf32> to vector<1x256xf32>
    %c0_14 = arith.constant 0 : index
    %c0_15 = arith.constant 0 : index
    %23 = vector.load %arg7[%c0_14, %c0_15] : memref<1x1xf32, #tpu.memory_space<vmem>>, vector<1x1xf32>
    %24 = vector.broadcast %23 : vector<1x1xf32> to vector<1x256xf32>
    %25 = arith.addf %22, %24 : vector<1x256xf32>
    %c0_16 = arith.constant 0 : index
    %c0_17 = arith.constant 0 : index
    %26 = vector.load %arg8[%c0_16, %c0_17] : memref<1x256xf32, #tpu.memory_space<vmem>>, vector<1x256xf32>
    tpu.vector_store %arg8[%c0_16, %c0_17], %25 {strides = array<i32>} : memref<1x256xf32, #tpu.memory_space<vmem>>, vector<1x256xf32>,
    return
  }
  func.func @transform_0(%arg0: i32) -> (i32, i32) {
    %c0_i32 = arith.constant 0 : i32
    %c0_i32_0 = arith.constant 0 : i32
    return %c0_i32, %arg0 : i32, i32
  }
  func.func @transform_1(%arg0: i32) -> (i32, i32) {
    %c0_i32 = arith.constant 0 : i32
    %c0_i32_0 = arith.constant 0 : i32
    %c0_i32_1 = arith.constant 0 : i32
    return %c0_i32, %c0_i32_0 : i32, i32
  }
  func.func @transform_2(%arg0: i32) -> (i32, i32) {
    %c0_i32 = arith.constant 0 : i32
    %c0_i32_0 = arith.constant 0 : i32
    %c0_i32_1 = arith.constant 0 : i32
    return %c0_i32, %c0_i32_0 : i32, i32
  }
  func.func @transform_3(%arg0: i32) -> (i32, i32) {
    %c0_i32 = arith.constant 0 : i32
    %c0_i32_0 = arith.constant 0 : i32
    %c0_i32_1 = arith.constant 0 : i32
    return %c0_i32, %c0_i32_0 : i32, i32
  }
  func.func @transform_4(%arg0: i32) -> (i32, i32) {
    %c0_i32 = arith.constant 0 : i32
    %c0_i32_0 = arith.constant 0 : i32
    %c0_i32_1 = arith.constant 0 : i32
    return %c0_i32, %c0_i32_0 : i32, i32
  }
  func.func @transform_5(%arg0: i32) -> (i32, i32) {
    %c0_i32 = arith.constant 0 : i32
    %c0_i32_0 = arith.constant 0 : i32
    %c0_i32_1 = arith.constant 0 : i32
    return %c0_i32, %c0_i32_0 : i32, i32
  }
  func.func @transform_6(%arg0: i32) -> (i32, i32) {
    %c0_i32 = arith.constant 0 : i32
    %c0_i32_0 = arith.constant 0 : i32
    %c0_i32_1 = arith.constant 0 : i32
    return %c0_i32, %c0_i32_0 : i32, i32
  }
  func.func @transform_7(%arg0: i32) -> (i32, i32) {
    %c0_i32 = arith.constant 0 : i32
    %c0_i32_0 = arith.constant 0 : i32
    return %c0_i32, %arg0 : i32, i32
  }
}

</mosaic_0001>

<llo_original>
// kernel: electric_demand_forward.1
$region0: #{electric_demand_forward.1}
  #allocation0 [shape = 'u32[]', space=smem, size = 0x4, offset = 0x4, fixed_abs, tag = 'smem constant byte address 0x4 - core index']
  #allocation1 [shape = 'u32[144,128]{1,0:T(1,128)}', space=vmem, size = 0x12000, scoped, tag = 'internal scratch']
  #allocation2 [shape = 'f32[1,1]{1,0:T(1,128)S(1)}', space=vmem, size = 0x200, scoped, tag = 'scoped memory for electric_demand_forward.1']
  %s0 = inlined_call_operand.vmem [shape: f32[1,300], index: 0, kind: input, shape index: {}]
  %s1 = inlined_call_operand.vmem [shape: f32[64,1], index: 1, kind: input, shape index: {}]
  %s2 = inlined_call_operand.vmem [shape: f32[64,1], index: 2, kind: input, shape index: {}]
  %s3 = inlined_call_operand.vmem [shape: bf16[64,64], index: 3, kind: input, shape index: {}]
  %s4 = inlined_call_operand.vmem [shape: f32[64,1], index: 4, kind: input, shape index: {}]
  %s5 = inlined_call_operand.vmem [shape: f32[64,1], index: 5, kind: input, shape index: {}]
  %s6 = inlined_call_operand.<no memory space> [shape: f32[1,1], index: 6, kind: input, shape index: {}]
  %s7 = inlined_call_operand.hbm [shape: f32[1,300], index: 7, kind: output, shape index: {}]
  %s8 = sld [smem:[#allocation0]]
  $region61: #{electric_demand_forward.1} parent=0
    _
  %s10 = ssub.s32 1, %s8
  %s11 = scalar_select 0, %s10, %s8
  %v12 = vstv %s6
  %13 = vst [vmem:[#allocation2] sm:$0x1] %v12
  $region1: #{electric_demand_forward.1} parent=0
    #allocation3 [shape = 'u8[2048]{0}', space=vmem, size = 0x800, scoped, tag = 'output window, operand 0']
    #allocation4 [shape = 's32[2]{0}', space=sflag, size = 0x8, scoped, tag = 'scoped memory for electric_demand_forward.1']
    %14 = vsyncpa [#allocation4], 0
    %s15 = scalar_lea.sflag [#allocation4], 1
    %16 = vsyncpa %s15, 0
    loop: start=0, step=1, limit=4
    $region2: #{electric_demand_forward.1} parent=1 // loop_pre_header
      _
    $region3: #{electric_demand_forward.1} parent=1 // loop_header
      %s18 = sphi 0, %s22
      %p19 = scmp.ge.s32.totalorder %s18, 4
      %s28 = sphi 0, %s30
      %s31 = sphi 0, %s28
      %s32 = sphi 0, %s31
      %s48 = sphi 0, %s32
      %s52 = sphi 0, %s52
      %s54 = sphi 0, %s52
      %s55 = sphi 0, %s54
      %s69 = sphi 0, %s55
      %s73 = sphi 0, %s73
      %s75 = sphi 0, %s73
      %s76 = sphi 0, %s75
      %s90 = sphi 0, %s76
      %s94 = sphi 0, %s94
      %s96 = sphi 0, %s94
      %s97 = sphi 0, %s96
      %s111 = sphi 0, %s97
      %s115 = sphi 0, %s115
      %s117 = sphi 0, %s115
      %s118 = sphi 0, %s117
      %s132 = sphi 0, %s118
      %s136 = sphi 0, %s136
      %s138 = sphi 0, %s136
      %s139 = sphi 0, %s138
      %s153 = sphi 0, %s139
      %s157 = sphi 0, %s157
      %s159 = sphi 0, %s157
      %s160 = sphi 0, %s159
      %s174 = sphi 0, %s160
      %s180 = sphi 0, %s182
      %s183 = sphi 0, %s180
      %s184 = sphi 0, %s183
      %s200 = sphi 0, %s184
    $region4: #{electric_demand_forward.1} parent=1 // loop_header_branch
      %21 = sbr.rel (%p19) target = $region8
    $region5: #{electric_demand_forward.1} parent=1 // loop_body
      %s23 = ssub.s32 %s18, 1
      %s24 = ssub.s32 %s18, 2
      %s25 = sadd.s32 %s18, 1
      %s26 = ssub.s32 %s18, %s25
      %p27 = scmp.eq.s32.totalorder %s26, 0
      %s29 = sadd.s32 %s28, 1
      %s30 = scalar_select %p27, %s28, %s29
      %p33 = pneg %p27
      %p34 = scmp.eq.s32.totalorder %s18, 1
      %p35 = por %p33, %p34
      %p36 = scmp.ne.s32.totalorder %s28, %s31
      %p37 = scmp.eq.s32.totalorder %s18, 0
      %p38 = por %p36, %p37
      %p39 = scmp.ne.s32.totalorder %s28, %s31
      %p40 = scmp.eq.s32.totalorder %s23, 1
      %p41 = por %p39, %p40
      %p42 = scmp.ne.s32.totalorder %s31, %s32
      %p43 = scmp.eq.s32.totalorder %s23, 0
      %p44 = por %p42, %p43
      %p45 = scmp.ne.s32.totalorder %s31, %s32
      %p46 = scmp.eq.s32.totalorder %s24, 1
      %p47 = por %p45, %p46
      %p49 = scmp.ne.s32.totalorder %s32, %s48
      %p50 = scmp.eq.s32.totalorder %s24, 0
      %p51 = por %p49, %p50
      %s53 = sadd.s32 %s52, 1
      %p56 = scmp.eq.s32.totalorder %s18, 1
      %p57 = scmp.ne.s32.totalorder %s52, %s54
      %p58 = scmp.eq.s32.totalorder %s18, 0
      %p59 = por %p57, %p58
      %p60 = scmp.ne.s32.totalorder %s52, %s54
      %p61 = scmp.eq.s32.totalorder %s23, 1
      %p62 = por %p60, %p61
      %p63 = scmp.ne.s32.totalorder %s54, %s55
      %p64 = scmp.eq.s32.totalorder %s23, 0
      %p65 = por %p63, %p64
      %p66 = scmp.ne.s32.totalorder %s54, %s55
      %p67 = scmp.eq.s32.totalorder %s24, 1
      %p68 = por %p66, %p67
      %p70 = scmp.ne.s32.totalorder %s55, %s69
      %p71 = scmp.eq.s32.totalorder %s24, 0
      %p72 = por %p70, %p71
      %s74 = sadd.s32 %s73, 1
      %p77 = scmp.eq.s32.totalorder %s18, 1
      %p78 = scmp.ne.s32.totalorder %s73, %s75
      %p79 = scmp.eq.s32.totalorder %s18, 0
      %p80 = por %p78, %p79
      %p81 = scmp.ne.s32.totalorder %s73, %s75
      %p82 = scmp.eq.s32.totalorder %s23, 1
      %p83 = por %p81, %p82
      %p84 = scmp.ne.s32.totalorder %s75, %s76
      %p85 = scmp.eq.s32.totalorder %s23, 0
      %p86 = por %p84, %p85
      %p87 = scmp.ne.s32.totalorder %s75, %s76
      %p88 = scmp.eq.s32.totalorder %s24, 1
      %p89 = por %p87, %p88
      %p91 = scmp.ne.s32.totalorder %s76, %s90
      %p92 = scmp.eq.s32.totalorder %s24, 0
      %p93 = por %p91, %p92
      %s95 = sadd.s32 %s94, 1
      %p98 = scmp.eq.s32.totalorder %s18, 1
      %p99 = scmp.ne.s32.totalorder %s94, %s96
      %p100 = scmp.eq.s32.totalorder %s18, 0
      %p101 = por %p99, %p100
      %p102 = scmp.ne.s32.totalorder %s94, %s96
      %p103 = scmp.eq.s32.totalorder %s23, 1
      %p104 = por %p102, %p103
      %p105 = scmp.ne.s32.totalorder %s96, %s97
      %p106 = scmp.eq.s32.totalorder %s23, 0
      %p107 = por %p105, %p106
      %p108 = scmp.ne.s32.totalorder %s96, %s97
      %p109 = scmp.eq.s32.totalorder %s24, 1
      %p110 = por %p108, %p109
      %p112 = scmp.ne.s32.totalorder %s97, %s111
      %p113 = scmp.eq.s32.totalorder %s24, 0
      %p114 = por %p112, %p113
      %s116 = sadd.s32 %s115, 1
      %p119 = scmp.eq.s32.totalorder %s18, 1
      %p120 = scmp.ne.s32.totalorder %s115, %s117
      %p121 = scmp.eq.s32.totalorder %s18, 0
      %p122 = por %p120, %p121
      %p123 = scmp.ne.s32.totalorder %s115, %s117
      %p124 = scmp.eq.s32.totalorder %s23, 1
      %p125 = por %p123, %p124
      %p126 = scmp.ne.s32.totalorder %s117, %s118
      %p127 = scmp.eq.s32.totalorder %s23, 0
      %p128 = por %p126, %p127
      %p129 = scmp.ne.s32.totalorder %s117, %s118
      %p130 = scmp.eq.s32.totalorder %s24, 1
      %p131 = por %p129, %p130
      %p133 = scmp.ne.s32.totalorder %s118, %s132
      %p134 = scmp.eq.s32.totalorder %s24, 0
      %p135 = por %p133, %p134
      %s137 = sadd.s32 %s136, 1
      %p140 = scmp.eq.s32.totalorder %s18, 1
      %p141 = scmp.ne.s32.totalorder %s136, %s138
      %p142 = scmp.eq.s32.totalorder %s18, 0
      %p143 = por %p141, %p142
      %p144 = scmp.ne.s32.totalorder %s136, %s138
      %p145 = scmp.eq.s32.totalorder %s23, 1
      %p146 = por %p144, %p145
      %p147 = scmp.ne.s32.totalorder %s138, %s139
      %p148 = scmp.eq.s32.totalorder %s23, 0
      %p149 = por %p147, %p148
      %p150 = scmp.ne.s32.totalorder %s138, %s139
      %p151 = scmp.eq.s32.totalorder %s24, 1
      %p152 = por %p150, %p151
      %p154 = scmp.ne.s32.totalorder %s139, %s153
      %p155 = scmp.eq.s32.totalorder %s24, 0
      %p156 = por %p154, %p155
      %s158 = sadd.s32 %s157, 1
      %p161 = scmp.eq.s32.totalorder %s18, 1
      %p162 = scmp.ne.s32.totalorder %s157, %s159
      %p163 = scmp.eq.s32.totalorder %s18, 0
      %p164 = por %p162, %p163
      %p165 = scmp.ne.s32.totalorder %s157, %s159
      %p166 = scmp.eq.s32.totalorder %s23, 1
      %p167 = por %p165, %p166
      %p168 = scmp.ne.s32.totalorder %s159, %s160
      %p169 = scmp.eq.s32.totalorder %s23, 0
      %p170 = por %p168, %p169
      %p171 = scmp.ne.s32.totalorder %s159, %s160
      %p172 = scmp.eq.s32.totalorder %s24, 1
      %p173 = por %p171, %p172
      %p175 = scmp.ne.s32.totalorder %s160, %s174
      %p176 = scmp.eq.s32.totalorder %s24, 0
      %p177 = por %p175, %p176
      %s178 = ssub.s32 %s18, %s25
      %p179 = scmp.eq.s32.totalorder %s178, 0
      %s181 = sadd.s32 %s180, 1
      %s182 = scalar_select %p179, %s180, %s181
      %p185 = pneg %p179
      %p186 = scmp.eq.s32.totalorder %s18, 1
      %p187 = por %p185, %p186
      %p188 = scmp.ne.s32.totalorder %s180, %s183
      %p189 = scmp.eq.s32.totalorder %s18, 0
      %p190 = por %p188, %p189
      %p191 = scmp.ne.s32.totalorder %s180, %s183
      %p192 = scmp.eq.s32.totalorder %s23, 1
      %p193 = por %p191, %p192
      %p194 = scmp.ne.s32.totalorder %s183, %s184
      %p195 = scmp.eq.s32.totalorder %s23, 0
      %p196 = por %p194, %p195
      %p197 = scmp.ne.s32.totalorder %s183, %s184
      %p198 = scmp.eq.s32.totalorder %s24, 1
      %p199 = por %p197, %p198
      %p201 = scmp.ne.s32.totalorder %s184, %s200
      %p202 = scmp.eq.s32.totalorder %s24, 0
      %p203 = por %p201, %p202
      %p204 = scmp.le.s32.totalorder 1, %s18
      %p205 = scmp.lt.s32.totalorder %s18, 3
      %p206 = pnand %p204, %p205
      %p207 = pneg %p206
      // Predicated region
      $region9: #{electric_demand_forward.1} parent=5 // pred_check
        _
      $region10: #{electric_demand_forward.1} parent=5 // pred_check_branch
        %209 = sbr.rel (%p206) target = $region12
      $region11: #{electric_demand_forward.1} parent=5 // pred_region
        %s210 = ssub.s32 %s18, 1
        // Predicated region
        $region13: #{electric_demand_forward.1} parent=11 // pred_check
          %p211 = pneg %p65
        $region14: #{electric_demand_forward.1} parent=11 // pred_check_branch
          %213 = sbr.rel (%p211) target = $region16
        $region15: #{electric_demand_forward.1} parent=11 // pred_region
          _
        $region16: #{electric_demand_forward.1} parent=11 // pred_fallthru
          _
        // Predicated region
        $region17: #{electric_demand_forward.1} parent=11 // pred_check
          %p214 = pneg %p86
        $region18: #{electric_demand_forward.1} parent=11 // pred_check_branch
          %216 = sbr.rel (%p214) target = $region20
        $region19: #{electric_demand_forward.1} parent=11 // pred_region
          _
        $region20: #{electric_demand_forward.1} parent=11 // pred_fallthru
          _
        // Predicated region
        $region21: #{electric_demand_forward.1} parent=11 // pred_check
          %p217 = pneg %p107
        $region22: #{electric_demand_forward.1} parent=11 // pred_check_branch
          %219 = sbr.rel (%p217) target = $region24
        $region23: #{electric_demand_forward.1} parent=11 // pred_region
          _
        $region24: #{electric_demand_forward.1} parent=11 // pred_fallthru
          _
        // Predicated region
        $region25: #{electric_demand_forward.1} parent=11 // pred_check
          %p220 = pneg %p128
        $region26: #{electric_demand_forward.1} parent=11 // pred_check_branch
          %222 = sbr.rel (%p220) target = $region28
        $region27: #{electric_demand_forward.1} parent=11 // pred_region
          _
        $region28: #{electric_demand_forward.1} parent=11 // pred_fallthru
          _
        // Predicated region
        $region29: #{electric_demand_forward.1} parent=11 // pred_check
          %p223 = pneg %p149
        $region30: #{electric_demand_forward.1} parent=11 // pred_check_branch
          %225 = sbr.rel (%p223) target = $region32
        $region31: #{electric_demand_forward.1} parent=11 // pred_region
          _
        $region32: #{electric_demand_forward.1} parent=11 // pred_fallthru
          _
        // Predicated region
        $region33: #{electric_demand_forward.1} parent=11 // pred_check
          %p226 = pneg %p170
        $region34: #{electric_demand_forward.1} parent=11 // pred_check_branch
          %228 = sbr.rel (%p226) target = $region36
        $region35: #{electric_demand_forward.1} parent=11 // pred_region
          _
        $region36: #{electric_demand_forward.1} parent=11 // pred_fallthru
          _
      $region12: #{electric_demand_forward.1} parent=5 // pred_fallthru
        _
      %p229 = scmp.lt.s32.totalorder %s18, 2
      // Predicated region
      $region37: #{electric_demand_forward.1} parent=5 // pred_check
        %p230 = pneg %p229
      $region38: #{electric_demand_forward.1} parent=5 // pred_check_branch
        %232 = sbr.rel (%p230) target = $region40
      $region39: #{electric_demand_forward.1} parent=5 // pred_region
        // Predicated region
        $region41: #{electric_demand_forward.1} parent=39 // pred_check
          %p233 = pneg %p38
        $region42: #{electric_demand_forward.1} parent=39 // pred_check_branch
          %235 = sbr.rel (%p233) target = $region44
        $region43: #{electric_demand_forward.1} parent=39 // pred_region
          %s236 = smul.u32 2, %s18
          %s237 = ssub.s32 3, %s236
          %p238 = scmp.lt.s32.totalorder %s237, 2
          %s239 = scalar_select %p238, %s237, 2
          %s240 = smul.u32 16, %s239
          %p241 = scmp.lt.s32.totalorder %s236, 2
          %s242 = scalar_select %p241, %s236, 2
          %s243 = scalar_lea.vmem %s0, %s242
          %s244 = smul.u32 2, %s18
          %s245 = ssub.s32 3, %s244
          %p246 = scmp.lt.s32.totalorder %s245, 2
          %s247 = scalar_select %p246, %s245, 2
          %s248 = smul.u32 16, %s247
        $region44: #{electric_demand_forward.1} parent=39 // pred_fallthru
          _
      $region40: #{electric_demand_forward.1} parent=5 // pred_fallthru
        _
      %p249 = scmp.le.s32.totalorder 1, %s18
      %p250 = scmp.lt.s32.totalorder %s18, 3
      %p251 = pnand %p249, %p250
      %p252 = pneg %p251
      // Predicated region
      $region45: #{electric_demand_forward.1} parent=5 // pred_check
        _
      $region46: #{electric_demand_forward.1} parent=5 // pred_check_branch
        %254 = sbr.rel (%p251) target = $region48
      $region47: #{electric_demand_forward.1} parent=5 // pred_region
        %s255 = ssub.s32 %s18, 1
        %s256 = smul.u32 2, %s23
        %s257 = ssub.s32 3, %s256
        %p258 = scmp.lt.s32.totalorder %s257, 2
        %s259 = scalar_select %p258, %s257, 2
        %s260 = smul.u32 16, %s259
        %p261 = scmp.lt.s32.totalorder %s256, 2
        %s262 = scalar_select %p261, %s256, 2
        %s263 = scalar_lea.vmem %s0, %s262
        %p264 = pneg %p44
        %p265 = pneg %p41
        %p266 = pneg %p65
        %p267 = pneg %p62
        %p268 = pneg %p86
        %p269 = pneg %p83
        %p270 = pneg %p107
        %p271 = pneg %p104
        %p272 = pneg %p128
        %p273 = pneg %p125
        %p274 = pneg %p149
        %p275 = pneg %p146
        %p276 = pneg %p170
        %p277 = pneg %p167
        %p278 = pneg %p196
        %p279 = pneg %p193
        %s280 = sand.u32 %s183, 1
        %s281 = scalar_lea.sflag [#allocation4], %s280
        %s282 = sand.u32 %s183, 1
        %s283 = smul.addr %s282, 2
        %s284 = scalar_lea.vmem [#allocation3], %s283
        %s285 = smul.u32 2, %s23
        %s286 = ssub.s32 3, %s285
        %p287 = scmp.lt.s32.totalorder %s286, 2
        %s288 = scalar_select %p287, %s286, 2
        %s289 = smul.u32 16, %s288
        %p290 = scmp.lt.s32.totalorder %s285, 2
        %s291 = scalar_select %p290, %s285, 2
        %s292 = scalar_lea.vmem %s0, %s291
        %s293 = smul.u32 2, %s23
        %s294 = ssub.s32 3, %s293
        %p295 = scmp.lt.s32.totalorder %s294, 2
        %s296 = scalar_select %p295, %s294, 2
        %s297 = smul.u32 16, %s296
        %s298 = smul.u32 2, %s23
        %s299 = ssub.s32 3, %s298
        %p300 = scmp.lt.s32.totalorder %s299, 2
        %s301 = scalar_select %p300, %s299, 2
        %s302 = smul.u32 16, %s301
        %v304 = vld [vmem:[%s292] sm:$0x3]
        %v305 = vld [vmem:[%s1] sm:$0xff]
        %v306 = vld [vmem:[%s1 + $0x8] sm:$0xff]
        %v307 = vld [vmem:[%s1 + $0x10] sm:$0xff]
        %v308 = vld [vmem:[%s1 + $0x18] sm:$0xff]
        %v309 = vld [vmem:[%s1 + $0x20] sm:$0xff]
        %v310 = vld [vmem:[%s1 + $0x28] sm:$0xff]
        %v311 = vld [vmem:[%s1 + $0x30] sm:$0xff]
        %v312 = vld [vmem:[%s1 + $0x38] sm:$0xff]
        %314 = vset.pattern.permute.xlu0 0
        %315 = vperm.xlu0 %314, %v305
        %v316 = vpop.permute.xlu0 %315
        %319 = vset.pattern.permute.xlu0 0
        %320 = vperm.xlu0 %319, %v306
        %v321 = vpop.permute.xlu0 %320
        %324 = vset.pattern.permute.xlu0 0
        %325 = vperm.xlu0 %324, %v307
        %v326 = vpop.permute.xlu0 %325
        %329 = vset.pattern.permute.xlu0 0
        %330 = vperm.xlu0 %329, %v308
        %v331 = vpop.permute.xlu0 %330
        %334 = vset.pattern.permute.xlu0 0
        %335 = vperm.xlu0 %334, %v309
        %v336 = vpop.permute.xlu0 %335
        %339 = vset.pattern.permute.xlu0 0
        %340 = vperm.xlu0 %339, %v310
        %v341 = vpop.permute.xlu0 %340
        %344 = vset.pattern.permute.xlu0 0
        %345 = vperm.xlu0 %344, %v311
        %v346 = vpop.permute.xlu0 %345
        %349 = vset.pattern.permute.xlu0 0
        %350 = vperm.xlu0 %349, %v312
        %v351 = vpop.permute.xlu0 %350
        %v354 = vlaneseq
        %v355 = vshrl.u32 %v354, 7
        %v356 = vsub.s32 0, %v355
        %v357 = vrot.slane %v304, %v356
        %v358 = vlaneseq
        %v359 = vshrl.u32 %v358, 7
        %v360 = vsub.s32 1, %v359
        %v361 = vrot.slane %v304, %v360
        %v364 = vmul.f32 %v316, %v357
        %v365 = vmul.f32 %v316, %v361
        %v366 = vmul.f32 %v321, %v357
        %v367 = vmul.f32 %v321, %v361
        %v368 = vmul.f32 %v326, %v357
        %v369 = vmul.f32 %v326, %v361
        %v370 = vmul.f32 %v331, %v357
        %v371 = vmul.f32 %v331, %v361
        %v372 = vmul.f32 %v336, %v357
        %v373 = vmul.f32 %v336, %v361
        %v374 = vmul.f32 %v341, %v357
        %v375 = vmul.f32 %v341, %v361
        %v376 = vmul.f32 %v346, %v357
        %v377 = vmul.f32 %v346, %v361
        %v378 = vmul.f32 %v351, %v357
        %v379 = vmul.f32 %v351, %v361
        %v380 = vld [vmem:[%s2] sm:$0xff]
        %v381 = vld [vmem:[%s2 + $0x8] sm:$0xff]
        %v382 = vld [vmem:[%s2 + $0x10] sm:$0xff]
        %v383 = vld [vmem:[%s2 + $0x18] sm:$0xff]
        %v384 = vld [vmem:[%s2 + $0x20] sm:$0xff]
        %v385 = vld [vmem:[%s2 + $0x28] sm:$0xff]
        %v386 = vld [vmem:[%s2 + $0x30] sm:$0xff]
        %v387 = vld [vmem:[%s2 + $0x38] sm:$0xff]
        %389 = vset.pattern.permute.xlu0 0
        %390 = vperm.xlu0 %389, %v380
        %v391 = vpop.permute.xlu0 %390
        %394 = vset.pattern.permute.xlu0 0
        %395 = vperm.xlu0 %394, %v381
        %v396 = vpop.permute.xlu0 %395
        %399 = vset.pattern.permute.xlu0 0
        %400 = vperm.xlu0 %399, %v382
        %v401 = vpop.permute.xlu0 %400
        %404 = vset.pattern.permute.xlu0 0
        %405 = vperm.xlu0 %404, %v383
        %v406 = vpop.permute.xlu0 %405
        %409 = vset.pattern.permute.xlu0 0
        %410 = vperm.xlu0 %409, %v384
        %v411 = vpop.permute.xlu0 %410
        %414 = vset.pattern.permute.xlu0 0
        %415 = vperm.xlu0 %414, %v385
        %v416 = vpop.permute.xlu0 %415
        %419 = vset.pattern.permute.xlu0 0
        %420 = vperm.xlu0 %419, %v386
        %v421 = vpop.permute.xlu0 %420
        %424 = vset.pattern.permute.xlu0 0
        %425 = vperm.xlu0 %424, %v387
        %v426 = vpop.permute.xlu0 %425
        %v428 = vadd.f32 %v364, %v391
        %v429 = vadd.f32 %v365, %v391
        %v430 = vadd.f32 %v366, %v396
        %v431 = vadd.f32 %v367, %v396
        %v432 = vadd.f32 %v368, %v401
        %v433 = vadd.f32 %v369, %v401
        %v434 = vadd.f32 %v370, %v406
        %v435 = vadd.f32 %v371, %v406
        %v436 = vadd.f32 %v372, %v411
        %v437 = vadd.f32 %v373, %v411
        %v438 = vadd.f32 %v374, %v416
        %v439 = vadd.f32 %v375, %v416
        %v440 = vadd.f32 %v376, %v421
        %v441 = vadd.f32 %v377, %v421
        %v442 = vadd.f32 %v378, %v426
        %v443 = vadd.f32 %v379, %v426
        %v444 = vmax.f32 %v428, 0.0
        %v445 = vmax.f32 %v429, 0.0
        %v446 = vmax.f32 %v430, 0.0
        %v447 = vmax.f32 %v431, 0.0
        %v448 = vmax.f32 %v432, 0.0
        %v449 = vmax.f32 %v433, 0.0
        %v450 = vmax.f32 %v434, 0.0
        %v451 = vmax.f32 %v435, 0.0
        %v452 = vmax.f32 %v436, 0.0
        %v453 = vmax.f32 %v437, 0.0
        %v454 = vmax.f32 %v438, 0.0
        %v455 = vmax.f32 %v439, 0.0
        %v456 = vmax.f32 %v440, 0.0
        %v457 = vmax.f32 %v441, 0.0
        %v458 = vmax.f32 %v442, 0.0
        %v459 = vmax.f32 %v443, 0.0
        %v460 = vld [vmem:[%s3] sm:$0xf]
        %v461 = vld [vmem:[%s3 + $0x4] sm:$0xf]
        %v462 = vld [vmem:[%s3 + $0x8] sm:$0xf]
        %v463 = vld [vmem:[%s3 + $0xc] sm:$0xf]
        %v464 = vld [vmem:[%s3 + $0x10] sm:$0xf]
        %v465 = vld [vmem:[%s3 + $0x14] sm:$0xf]
        %v466 = vld [vmem:[%s3 + $0x18] sm:$0xf]
        %v467 = vld [vmem:[%s3 + $0x1c] sm:$0xf]
        %v468 = vpack.c.bf16 %v446, %v444
        %v469 = vpack.c.bf16 %v447, %v445
        %v470 = vpack.c.bf16 %v450, %v448
        %v471 = vpack.c.bf16 %v451, %v449
        %v472 = vpack.c.bf16 %v454, %v452
        %v473 = vpack.c.bf16 %v455, %v453
        %v474 = vpack.c.bf16 %v458, %v456
        %v475 = vpack.c.bf16 %v459, %v457
        %v476 = vld [vmem:[%s4] sm:$0xff]
        %v477 = vld [vmem:[%s4 + $0x8] sm:$0xff]
        %v478 = vld [vmem:[%s4 + $0x10] sm:$0xff]
        %v479 = vld [vmem:[%s4 + $0x18] sm:$0xff]
        %v480 = vld [vmem:[%s4 + $0x20] sm:$0xff]
        %v481 = vld [vmem:[%s4 + $0x28] sm:$0xff]
        %v482 = vld [vmem:[%s4 + $0x30] sm:$0xff]
        %v483 = vld [vmem:[%s4 + $0x38] sm:$0xff]
        %485 = vset.pattern.permute.xlu0 0
        %486 = vperm.xlu0 %485, %v476
        %v487 = vpop.permute.xlu0 %486
        %490 = vset.pattern.permute.xlu0 0
        %491 = vperm.xlu0 %490, %v477
        %v492 = vpop.permute.xlu0 %491
        %495 = vset.pattern.permute.xlu0 0
        %496 = vperm.xlu0 %495, %v478
        %v497 = vpop.permute.xlu0 %496
        %500 = vset.pattern.permute.xlu0 0
        %501 = vperm.xlu0 %500, %v479
        %v502 = vpop.permute.xlu0 %501
        %505 = vset.pattern.permute.xlu0 0
        %506 = vperm.xlu0 %505, %v480
        %v507 = vpop.permute.xlu0 %506
        %510 = vset.pattern.permute.xlu0 0
        %511 = vperm.xlu0 %510, %v481
        %v512 = vpop.permute.xlu0 %511
        %515 = vset.pattern.permute.xlu0 0
        %516 = vperm.xlu0 %515, %v482
        %v517 = vpop.permute.xlu0 %516
        %520 = vset.pattern.permute.xlu0 0
        %521 = vperm.xlu0 %520, %v483
        %v522 = vpop.permute.xlu0 %521
        %v532 = vunpack.c.l.b16 %v460
        %v533 = vunpack.c.l.b16 %v461
        %v534 = vunpack.c.l.b16 %v462
        %v535 = vunpack.c.l.b16 %v463
        %v536 = vunpack.c.l.b16 %v464
        %v537 = vunpack.c.l.b16 %v465
        %v538 = vunpack.c.l.b16 %v466
        %v539 = vunpack.c.l.b16 %v467
        %v540 = vpack.c.b16 %v533, %v532
        %v541 = vpack.c.b16 %v535, %v534
        %v542 = vpack.c.b16 %v537, %v536
        %v543 = vpack.c.b16 %v539, %v538
        %vm544 = vcmask 523264
        %v546 = vsel %vm544, %v540, 0
        %v549 = vsel %vm544, %v541, 0
        %v552 = vsel %vm544, %v542, 0
        %v555 = vsel %vm544, %v543, 0
        %557 = vmatprep.subr.bf16.mxu0 %v469
        %558 = vmatpush1.bf16.msra.mxu0 %v468
        %559 = vmatprep.subr.bf16.mxu0 %v471
        %560 = vmatpush1.bf16.msra.mxu0 %v470
        %561 = vmatprep.subr.bf16.mxu0 %v473
        %562 = vmatpush1.bf16.msra.mxu0 %v472
        %563 = vmatprep.subr.bf16.mxu0 %v475
        %564 = vmatpush1.bf16.msra.mxu0 %v474
        %565 = vmatprep.subr.bf16.mxu0 0
        %566 = vmatpush1.bf16.msra.mxu0 0
        %567 = vmatprep.subr.bf16.mxu0 0
        %568 = vmatpush1.bf16.msra.mxu0 0
        %569 = vmatprep.subr.bf16.mxu0 0
        %570 = vmatpush1.bf16.msra.mxu0 0
        %571 = vmatprep.subr.bf16.mxu0 0
        %572 = vmatpush1.bf16.msra.mxu0 0
        %573 = vmatprep.subr.bf16.mxu0 0
        %574 = vmatpush1.bf16.msra.mxu0 0
        %575 = vmatprep.subr.bf16.mxu0 0
        %576 = vmatpush1.bf16.msra.mxu0 0
        %577 = vmatprep.subr.bf16.mxu0 0
        %578 = vmatpush1.bf16.msra.mxu0 0
        %579 = vmatprep.subr.bf16.mxu0 0
        %580 = vmatpush1.bf16.msra.mxu0 0
        %581 = vmatprep.subr.bf16.mxu0 0
        %582 = vmatpush1.bf16.msra.mxu0 0
        %583 = vmatprep.subr.bf16.mxu0 0
        %584 = vmatpush1.bf16.msra.mxu0 0
        %585 = vmatprep.subr.bf16.mxu0 0
        %586 = vmatpush1.bf16.msra.mxu0 0
        %587 = vmatprep.subr.bf16.mxu0 0
        %588 = vmatpush1.bf16.msra.mxu0 0
        %589 = vmatprep.mubr.bf16.mxu0 0
        %590 = vmatmul.mubr.bf16.gmra.mrb[0].mxu0 %v546
        %v591 = vpop.f32.mrb[0].mxu0
        %v592 = vadd.f32 %v487, %v591
        %v593 = vpop.f32.mrb[0].mxu0
        %v594 = vadd.f32 %v487, %v593
        %v595 = vpop.f32.mrb[0].mxu0
        %v596 = vadd.f32 %v492, %v595
        %v597 = vpop.f32.mrb[0].mxu0
        %v598 = vadd.f32 %v492, %v597
        %599 = vmatprep.mubr.bf16.mxu0 0
        %600 = vmatmul.mubr.bf16.gmra.mrb[0].mxu0 %v549
        %v601 = vpop.f32.mrb[0].mxu0
        %v602 = vadd.f32 %v497, %v601
        %v603 = vpop.f32.mrb[0].mxu0
        %v604 = vadd.f32 %v497, %v603
        %v605 = vpop.f32.mrb[0].mxu0
        %v606 = vadd.f32 %v502, %v605
        %v607 = vpop.f32.mrb[0].mxu0
        %v608 = vadd.f32 %v502, %v607
        %609 = vmatprep.mubr.bf16.mxu0 0
        %610 = vmatmul.mubr.bf16.gmra.mrb[0].mxu0 %v552
        %v611 = vpop.f32.mrb[0].mxu0
        %v612 = vadd.f32 %v507, %v611
        %v613 = vpop.f32.mrb[0].mxu0
        %v614 = vadd.f32 %v507, %v613
        %v615 = vpop.f32.mrb[0].mxu0
        %v616 = vadd.f32 %v512, %v615
        %v617 = vpop.f32.mrb[0].mxu0
        %v618 = vadd.f32 %v512, %v617
        %619 = vmatprep.mubr.bf16.mxu0 0
        %620 = vmatmul.mubr.bf16.gmra.mrb[0].mxu0 %v555
        %v621 = vpop.f32.mrb[0].mxu0
        %v622 = vadd.f32 %v517, %v621
        %v623 = vpop.f32.mrb[0].mxu0
        %v624 = vadd.f32 %v517, %v623
        %v625 = vpop.f32.mrb[0].mxu0
        %v626 = vadd.f32 %v522, %v625
        %v627 = vpop.f32.mrb[0].mxu0
        %v628 = vadd.f32 %v522, %v627
        %629 = vdwg.mxu0
        %v630 = vmax.f32 %v592, 0.0
        %v631 = vmax.f32 %v594, 0.0
        %v632 = vmax.f32 %v596, 0.0
        %v633 = vmax.f32 %v598, 0.0
        %v634 = vmax.f32 %v602, 0.0
        %v635 = vmax.f32 %v604, 0.0
        %v636 = vmax.f32 %v606, 0.0
        %v637 = vmax.f32 %v608, 0.0
        %v638 = vmax.f32 %v612, 0.0
        %v639 = vmax.f32 %v614, 0.0
        %v640 = vmax.f32 %v616, 0.0
        %v641 = vmax.f32 %v618, 0.0
        %v642 = vmax.f32 %v622, 0.0
        %v643 = vmax.f32 %v624, 0.0
        %v644 = vmax.f32 %v626, 0.0
        %v645 = vmax.f32 %v628, 0.0
        %v646 = vld [vmem:[%s5] sm:$0xff]
        %v647 = vld [vmem:[%s5 + $0x8] sm:$0xff]
        %v648 = vld [vmem:[%s5 + $0x10] sm:$0xff]
        %v649 = vld [vmem:[%s5 + $0x18] sm:$0xff]
        %v650 = vld [vmem:[%s5 + $0x20] sm:$0xff]
        %v651 = vld [vmem:[%s5 + $0x28] sm:$0xff]
        %v652 = vld [vmem:[%s5 + $0x30] sm:$0xff]
        %v653 = vld [vmem:[%s5 + $0x38] sm:$0xff]
        %655 = vset.pattern.permute.xlu0 0
        %656 = vperm.xlu0 %655, %v646
        %v657 = vpop.permute.xlu0 %656
        %660 = vset.pattern.permute.xlu0 0
        %661 = vperm.xlu0 %660, %v647
        %v662 = vpop.permute.xlu0 %661
        %665 = vset.pattern.permute.xlu0 0
        %666 = vperm.xlu0 %665, %v648
        %v667 = vpop.permute.xlu0 %666
        %670 = vset.pattern.permute.xlu0 0
        %671 = vperm.xlu0 %670, %v649
        %v672 = vpop.permute.xlu0 %671
        %675 = vset.pattern.permute.xlu0 0
        %676 = vperm.xlu0 %675, %v650
        %v677 = vpop.permute.xlu0 %676
        %680 = vset.pattern.permute.xlu0 0
        %681 = vperm.xlu0 %680, %v651
        %v682 = vpop.permute.xlu0 %681
        %685 = vset.pattern.permute.xlu0 0
        %686 = vperm.xlu0 %685, %v652
        %v687 = vpop.permute.xlu0 %686
        %690 = vset.pattern.permute.xlu0 0
        %691 = vperm.xlu0 %690, %v653
        %v692 = vpop.permute.xlu0 %691
        %v694 = vmul.f32 %v657, %v630
        %v695 = vmul.f32 %v657, %v631
        %v696 = vmul.f32 %v662, %v632
        %v697 = vmul.f32 %v662, %v633
        %v698 = vmul.f32 %v667, %v634
        %v699 = vmul.f32 %v667, %v635
        %v700 = vmul.f32 %v672, %v636
        %v701 = vmul.f32 %v672, %v637
        %v702 = vmul.f32 %v677, %v638
        %v703 = vmul.f32 %v677, %v639
        %v704 = vmul.f32 %v682, %v640
        %v705 = vmul.f32 %v682, %v641
        %v706 = vmul.f32 %v687, %v642
        %v707 = vmul.f32 %v687, %v643
        %v708 = vmul.f32 %v692, %v644
        %v709 = vmul.f32 %v692, %v645
        %v710 = vadd.f32 %v694, %v696
        %v711 = vadd.f32 %v710, %v698
        %v712 = vadd.f32 %v711, %v700
        %v713 = vadd.f32 %v712, %v702
        %v714 = vadd.f32 %v713, %v704
        %v715 = vadd.f32 %v714, %v706
        %v716 = vadd.f32 %v715, %v708
        %v717 = vrot.slane %v716, 4
        %v718 = vadd.f32 %v716, %v717
        %v719 = vrot.slane %v718, 2
        %v720 = vadd.f32 %v718, %v719
        %v721 = vrot.slane %v720, 1
        %v722 = vadd.f32 %v720, %v721
        %v723 = vadd.f32 %v695, %v697
        %v724 = vadd.f32 %v723, %v699
        %v725 = vadd.f32 %v724, %v701
        %v726 = vadd.f32 %v725, %v703
        %v727 = vadd.f32 %v726, %v705
        %v728 = vadd.f32 %v727, %v707
        %v729 = vadd.f32 %v728, %v709
        %v730 = vrot.slane %v729, 4
        %v731 = vadd.f32 %v729, %v730
        %v732 = vrot.slane %v731, 2
        %v733 = vadd.f32 %v731, %v732
        %v734 = vrot.slane %v733, 1
        %v735 = vadd.f32 %v733, %v734
        %v736 = vld [vmem:[#allocation2] sm:$0x1]
        %738 = vset.pattern.permute.xlu0 0
        %739 = vperm.xlu0 %738, %v736
        %v740 = vpop.permute.xlu0 %739
        %v742 = vlaneseq
        %v743 = vshrl.u32 %v742, 7
        %v744 = vsub.s32 0, %v743
        %v745 = vrot.slane %v740, %v744
        %v746 = vadd.f32 %v722, %v745
        %v747 = vadd.f32 %v735, %v745
        %v750 = vcombine.low %v746, %v747
        %v752 = vunpack.c.l.s4 1966171168
        %v753 = vunpack.c.0.s8 %v752
        %v754 = vlaneseq
        %v755 = vshrl.u32 %v754, 7
        %v756 = vsub.s32 %v753, %v755
        %v757 = vrot.slane %v750, %v756
        %v759 = vunpack.c.l.s4 1966171168
        %v760 = vunpack.c.0.s8 %v759
        %v761 = vlaneseq
        %v762 = vshrl.u32 %v761, 7
        %v763 = vsub.s32 %v760, %v762
        %v764 = vrot.slane %v757, %v763
        %v766 = vlaneseq
        %vm767 = vcmp.ge.s32.totalorder %v766, 0
        %vm768 = vcmp.lt.s32.totalorder %v766, 256
        %vm769 = vmand %vm767, %vm768
        %770 = vst.msk [vmem:[%s284] sm:$0x3] %vm769, %v764
        %s771 = sand.u32 %s183, 1
        %s772 = scalar_lea.sflag [#allocation4], %s771
        %s773 = sand.u32 %s183, 1
        %s774 = smul.addr %s773, 2
        %s775 = scalar_lea.vmem [#allocation3], %s774
        // Predicated region
        $region49: #{electric_demand_forward.1} parent=47 // pred_check
          %p776 = pneg %p193
        $region50: #{electric_demand_forward.1} parent=47 // pred_check_branch
          %778 = sbr.rel (%p776) target = $region52
        $region51: #{electric_demand_forward.1} parent=47 // pred_region
          %s779 = smul.u32 2, %s23
          %s780 = ssub.s32 3, %s779
          %p781 = scmp.lt.s32.totalorder %s780, 2
          %s782 = scalar_select %p781, %s780, 2
          %s783 = smul.u32 16, %s782
          %s785 = ssub.s32 32, %s783
          %786 = vsyncadd %s772, %s785
          %p787 = scmp.ne.s32.totalorder 0, %s783
          %s788 = smul.addr %s779, 16
          %s789 = scalar_lea.hbm %s7, %s788
          %s790 = sshll.u32 %s782, 4
          %s791 = sshll.u32 %s775, 4
          %s792 = int_to_ptr.vmem [resolvable:$true] %s791
          %794 = dma.vmem_to_hbm [thread:$0]  (%p787), %s792, %s790, %s789, %s772
        $region52: #{electric_demand_forward.1} parent=47 // pred_fallthru
          _
      $region48: #{electric_demand_forward.1} parent=5 // pred_fallthru
        _
      %p795 = scmp.le.s32.totalorder 2, %s18
      // Predicated region
      $region53: #{electric_demand_forward.1} parent=5 // pred_check
        %p796 = pneg %p795
      $region54: #{electric_demand_forward.1} parent=5 // pred_check_branch
        %798 = sbr.rel (%p796) target = $region56
      $region55: #{electric_demand_forward.1} parent=5 // pred_region
        %s799 = ssub.s32 %s18, 2
        // Predicated region
        $region57: #{electric_demand_forward.1} parent=55 // pred_check
          %p800 = pneg %p199
        $region58: #{electric_demand_forward.1} parent=55 // pred_check_branch
          %802 = sbr.rel (%p800) target = $region60
        $region59: #{electric_demand_forward.1} parent=55 // pred_region
          %s803 = sand.u32 %s184, 1
          %s804 = scalar_lea.sflag [#allocation4], %s803
          %s805 = sand.u32 %s184, 1
          %s806 = smul.addr %s805, 2
          %s807 = scalar_lea.vmem [#allocation3], %s806
          %808 = dma.done %s804, 32
        $region60: #{electric_demand_forward.1} parent=55 // pred_fallthru
          _
      $region56: #{electric_demand_forward.1} parent=5 // pred_fallthru
        _
    $region6: #{electric_demand_forward.1} parent=1 // loop_footer
      %s22 = sadd.s32 1, %s18
    $region7: #{electric_demand_forward.1} parent=1 // loop_footer_branch
      %17 = sbr.rel target = $region3
    $region8: #{electric_demand_forward.1} parent=1 // loop_exit
      _
    %809 = vsyncpa [#allocation4], 1
    %s810 = scalar_lea.sflag [#allocation4], 1
    %811 = vsyncpa %s810, 1

</llo_original>
